<compile_context>
chip_gen: v5e
topology: v5e:2x2
jax: 0.10.0
libtpu: 0.0.40
codegen_flags: <defaults>
</compile_context>

<pallas_src>
import functools

import jax
import jax.numpy as jnp
from jax import lax
from jax.experimental import pallas as pl
from jax.experimental.pallas import tpu as pltpu


# ----------------------------------------------------------------------------
# Pallas kernel — whole batch, whole recurrence, one invocation
# ----------------------------------------------------------------------------
def _ggnn_kernel(x_ref, ain_ref, aout_ref,
                 win_ref, wout_ref, w3u_ref, w5u_ref,
                 bz_ref, br_ref, bh_ref,
                 o_ref, *, time_step, feat_dim):
    D = feat_dim

    h0 = x_ref[...]             # (B*N, D)   node states
    a_in_m = ain_ref[...]       # (B*N, B*N) block-diag in_matrix
    a_out_m = aout_ref[...]     # (B*N, B*N) block-diag out_matrix
    w_in = win_ref[...]         # (D, 3D)    fused [W3_in | W4_in | W5_in]
    w_out = wout_ref[...]       # (D, 3D)    fused [W3_out | W4_out | W5_out]
    w3u = w3u_ref[...]          # (D, D)
    w5u = w5u_ref[...]          # (D, D)
    bz = bz_ref[...]            # (1, D) = b3w + b3u
    br = br_ref[...]            # (1, D) = b4w + b3u
    bh = bh_ref[...]            # (1, D) = b5w + b5u

    def step(_, h):
        # Aggregation: one matmul per direction for the whole batch.
        a_in = jnp.dot(a_in_m, h, preferred_element_type=jnp.float32)
        a_out = jnp.dot(a_out_m, h, preferred_element_type=jnp.float32)

        # Fused av-side projection for the z / r / h gates: (B*N, 3D).
        g = (jnp.dot(a_in, w_in, preferred_element_type=jnp.float32)
             + jnp.dot(a_out, w_out, preferred_element_type=jnp.float32))

        # Shared recurrent term (fc_eq3_u), reused by both z and r gates.
        hu = jnp.dot(h, w3u, preferred_element_type=jnp.float32)

        zv = jax.nn.sigmoid(g[:, 0:D] + hu + bz)
        # NOTE: reference reuses fc_eq3_u here (fc_eq4_u unused in forward).
        rv = jax.nn.sigmoid(g[:, D:2 * D] + hu + br)
        hv = jnp.tanh(g[:, 2 * D:3 * D]
                      + jnp.dot(rv * h, w5u, preferred_element_type=jnp.float32)
                      + bh)

        # Dropout layers are identity in eval mode.
        return (1.0 - zv) * h + zv * hv

    h = lax.fori_loop(0, time_step, step, h0, unroll=True)
    o_ref[...] = h.astype(o_ref.dtype)


# ----------------------------------------------------------------------------
# Wrapper
# ----------------------------------------------------------------------------
def ggnn_forward(x, in_matrix, out_matrix, params, time_step):
    """x: (B, N, D) float32.  Returns (B, N, D) updated node states.

    (The PyTorch forward also returns the unchanged in_matrix as a second
    element — a trivial passthrough, omitted here.)
    """
    B, N, D = x.shape
    f32 = jnp.float32

    (w3w, b3w), (w3u, b3u), (w4w, b4w), (w5w, b5w), (w5u, b5u) = (
        params["eq3_w"], params["eq3_u"], params["eq4_w"],
        params["eq5_w"], params["eq5_u"])

    def wt(w):  # PyTorch (out, in) -> (in, out) so kernel does x @ W_T
        return jnp.asarray(w, f32).T

    w3wt, w4wt, w5wt = wt(w3w), wt(w4w), wt(w5w)        # (2D, D) each
    # Split each into in/out halves and fuse the three gates along columns.
    w_in_f = jnp.concatenate([w3wt[:D], w4wt[:D], w5wt[:D]], axis=1)   # (D, 3D)
    w_out_f = jnp.concatenate([w3wt[D:], w4wt[D:], w5wt[D:]], axis=1)  # (D, 3D)
    w3ut, w5ut = wt(w3u), wt(w5u)                        # (D, D)

    bz = (jnp.asarray(b3w, f32) + jnp.asarray(b3u, f32)).reshape(1, D)
    br = (jnp.asarray(b4w, f32) + jnp.asarray(b3u, f32)).reshape(1, D)
    bh = (jnp.asarray(b5w, f32) + jnp.asarray(b5u, f32)).reshape(1, D)

    # Block-diagonal adjacency: one matmul aggregates the whole batch
    # (in_matrix is shared across the batch in the reference).
    eye_b = jnp.eye(B, dtype=f32)
    a_in_blk = jnp.kron(eye_b, jnp.asarray(in_matrix, f32))    # (B*N, B*N)
    a_out_blk = jnp.kron(eye_b, jnp.asarray(out_matrix, f32))  # (B*N, B*N)

    x_flat = jnp.asarray(x, f32).reshape(B * N, D)

    kernel = functools.partial(_ggnn_kernel, time_step=time_step, feat_dim=D)

    # Everything is small -> whole arrays resident in VMEM, no grid.
    vmem = pl.BlockSpec(memory_space=pltpu.MemorySpace.VMEM)

    out_flat = pl.pallas_call(
        kernel,
        out_shape=jax.ShapeDtypeStruct((B * N, D), f32),
        in_specs=[vmem] * 10,
        out_specs=vmem,
    )(x_flat, a_in_blk, a_out_blk, w_in_f, w_out_f, w3ut, w5ut, bz, br, bh)

    return out_flat.reshape(B, N, D)


# ----------------------------------------------------------------------------
# Pure-JAX reference (mirrors the PyTorch forward, eval mode)
# ----------------------------------------------------------------------------
def ggnn_reference(x, in_matrix, out_matrix, params, time_step):
    (w3w, b3w), (w3u, b3u), (w4w, b4w), (w5w, b5w), (w5u, b5u) = (
        params["eq3_w"], params["eq3_u"], params["eq4_w"],
        params["eq5_w"], params["eq5_u"])
    h = x
    for _ in range(time_step):
        a_in = jnp.einsum("ij,bjd->bid", in_matrix, h)
        a_out = jnp.einsum("ij,bjd->bid", out_matrix, h)
        av = jnp.concatenate([a_in, a_out], axis=-1)
        zv = jax.nn.sigmoid(av @ w3w.T + b3w + h @ w3u.T + b3u)
        rv = jax.nn.sigmoid(av @ w4w.T + b4w + h @ w3u.T + b3u)  # fc_eq3_u reused
        hv = jnp.tanh(av @ w5w.T + b5w + (rv * h) @ w5u.T + b5u)
        h = (1.0 - zv) * h + zv * hv
    return h


# ----------------------------------------------------------------------------
# Main
# ----------------------------------------------------------------------------
if __name__ == "__main__":
    B, N, D = 2, 8, 32       # batch, node_num, input_dim
    TIME_STEP = 3

    key = jax.random.PRNGKey(0)
    k_x, k_in, k_out, *k_lin = jax.random.split(key, 3 + 10)

    def linear_params(kw, kb, in_f, out_f):
        bound = 1.0 / (in_f ** 0.5)
        w = jax.random.uniform(kw, (out_f, in_f), jnp.float32, -bound, bound)
        b = jax.random.uniform(kb, (out_f,), jnp.float32, -bound, bound)
        return w, b

    params = {
        "eq3_w": linear_params(k_lin[0], k_lin[1], 2 * D, D),
        "eq3_u": linear_params(k_lin[2], k_lin[3], D, D),
        "eq4_w": linear_params(k_lin[4], k_lin[5], 2 * D, D),
        "eq5_w": linear_params(k_lin[6], k_lin[7], 2 * D, D),
        "eq5_u": linear_params(k_lin[8], k_lin[9], D, D),
    }
    # TODO(synk): fc_eq4_u exists in __init__ but is never used in forward; omitted.

    x = jax.random.normal(k_x, (B, N, D), jnp.float32)
    in_matrix = jax.random.uniform(k_in, (N, N), jnp.float32)
    out_matrix = jax.random.uniform(k_out, (N, N), jnp.float32)

    out = ggnn_forward(x, in_matrix, out_matrix, params, TIME_STEP)
    out = jax.block_until_ready(out)

    ref = ggnn_reference(x, in_matrix, out_matrix, params, TIME_STEP)
    ref = jax.block_until_ready(ref)

    assert out.shape == (B, N, D)
    assert jnp.allclose(out, ref, rtol=1e-3, atol=1e-3), (
        f"max abs diff = {jnp.max(jnp.abs(out - ref))}")

    print("KERNEL_OK")
</pallas_src>

<mosaic_0001>
module attributes {stable_mosaic.version = 11 : i64} {
  func.func @_ggnn_kernel(%arg0: memref<16x32xf32, #tpu.memory_space<vmem>>, %arg1: memref<16x16xf32, #tpu.memory_space<vmem>>, %arg2: memref<16x16xf32, #tpu.memory_space<vmem>>, %arg3: memref<32x96xf32, #tpu.memory_space<vmem>>, %arg4: memref<32x96xf32, #tpu.memory_space<vmem>>, %arg5: memref<32x32xf32, #tpu.memory_space<vmem>>, %arg6: memref<32x32xf32, #tpu.memory_space<vmem>>, %arg7: memref<1x32xf32, #tpu.memory_space<vmem>>, %arg8: memref<1x32xf32, #tpu.memory_space<vmem>>, %arg9: memref<1x32xf32, #tpu.memory_space<vmem>>, %arg10: memref<16x32xf32, #tpu.memory_space<vmem>>) attributes {dimension_semantics = [], scalar_prefetch = 0 : i64, scratch_operands = 0 : i64, tpu.core_type = #tpu.core_type<tc>} {
    %c0 = arith.constant 0 : index
    %c0_0 = arith.constant 0 : index
    %0 = vector.load %arg0[%c0, %c0_0] : memref<16x32xf32, #tpu.memory_space<vmem>>, vector<16x32xf32>
    %c0_1 = arith.constant 0 : index
    %c0_2 = arith.constant 0 : index
    %1 = vector.load %arg1[%c0_1, %c0_2] : memref<16x16xf32, #tpu.memory_space<vmem>>, vector<16x16xf32>
    %c0_3 = arith.constant 0 : index
    %c0_4 = arith.constant 0 : index
    %2 = vector.load %arg2[%c0_3, %c0_4] : memref<16x16xf32, #tpu.memory_space<vmem>>, vector<16x16xf32>
    %c0_5 = arith.constant 0 : index
    %c0_6 = arith.constant 0 : index
    %3 = vector.load %arg3[%c0_5, %c0_6] : memref<32x96xf32, #tpu.memory_space<vmem>>, vector<32x96xf32>
    %c0_7 = arith.constant 0 : index
    %c0_8 = arith.constant 0 : index
    %4 = vector.load %arg4[%c0_7, %c0_8] : memref<32x96xf32, #tpu.memory_space<vmem>>, vector<32x96xf32>
    %c0_9 = arith.constant 0 : index
    %c0_10 = arith.constant 0 : index
    %5 = vector.load %arg5[%c0_9, %c0_10] : memref<32x32xf32, #tpu.memory_space<vmem>>, vector<32x32xf32>
    %c0_11 = arith.constant 0 : index
    %c0_12 = arith.constant 0 : index
    %6 = vector.load %arg6[%c0_11, %c0_12] : memref<32x32xf32, #tpu.memory_space<vmem>>, vector<32x32xf32>
    %c0_13 = arith.constant 0 : index
    %c0_14 = arith.constant 0 : index
    %7 = vector.load %arg7[%c0_13, %c0_14] : memref<1x32xf32, #tpu.memory_space<vmem>>, vector<1x32xf32>
    %c0_15 = arith.constant 0 : index
    %c0_16 = arith.constant 0 : index
    %8 = vector.load %arg8[%c0_15, %c0_16] : memref<1x32xf32, #tpu.memory_space<vmem>>, vector<1x32xf32>
    %c0_17 = arith.constant 0 : index
    %c0_18 = arith.constant 0 : index
    %9 = vector.load %arg9[%c0_17, %c0_18] : memref<1x32xf32, #tpu.memory_space<vmem>>, vector<1x32xf32>
    %c0_i32 = arith.constant 0 : i32
    %cst = arith.constant dense<0.000000e+00> : vector<16x32xf32>
    %10 = tpu.matmul %1, %0, %cst {dimension_numbers = #tpu.dot_dimension_numbers<[1], [0], [0], [1], [0, 0, 1, 1], [], []>} : vector<16x16xf32>, vector<16x32xf32>, vector<16x32xf32> -> vector<16x32xf32>
    %cst_19 = arith.constant dense<0.000000e+00> : vector<16x32xf32>
    %11 = tpu.matmul %2, %0, %cst_19 {dimension_numbers = #tpu.dot_dimension_numbers<[1], [0], [0], [1], [0, 0, 1, 1], [], []>} : vector<16x16xf32>, vector<16x32xf32>, vector<16x32xf32> -> vector<16x32xf32>
    %cst_20 = arith.constant dense<0.000000e+00> : vector<16x96xf32>
    %12 = tpu.matmul %10, %3, %cst_20 {dimension_numbers = #tpu.dot_dimension_numbers<[1], [0], [0], [1], [0, 0, 1, 1], [], []>} : vector<16x32xf32>, vector<32x96xf32>, vector<16x96xf32> -> vector<16x96xf32>
    %cst_21 = arith.constant dense<0.000000e+00> : vector<16x96xf32>
    %13 = tpu.matmul %11, %4, %cst_21 {dimension_numbers = #tpu.dot_dimension_numbers<[1], [0], [0], [1], [0, 0, 1, 1], [], []>} : vector<16x32xf32>, vector<32x96xf32>, vector<16x96xf32> -> vector<16x96xf32>
    %14 = arith.addf %12, %13 : vector<16x96xf32>
    %cst_22 = arith.constant dense<0.000000e+00> : vector<16x32xf32>
    %15 = tpu.matmul %0, %5, %cst_22 {dimension_numbers = #tpu.dot_dimension_numbers<[1], [0], [0], [1], [0, 0, 1, 1], [], []>} : vector<16x32xf32>, vector<32x32xf32>, vector<16x32xf32> -> vector<16x32xf32>
    %16 = vector.extract_strided_slice %14 {offsets = [0, 0], sizes = [16, 32], strides = [1, 1]} : vector<16x96xf32> to vector<16x32xf32>
    %17 = arith.addf %16, %15 : vector<16x32xf32>
    %18 = vector.broadcast %7 : vector<1x32xf32> to vector<16x32xf32>
    %19 = arith.addf %17, %18 : vector<16x32xf32>
    %20 = arith.negf %19 : vector<16x32xf32>
    %21 = math.exp %20 : vector<16x32xf32>
    %cst_23 = arith.constant 1.000000e+00 : f32
    %22 = vector.broadcast %cst_23 : f32 to vector<16x32xf32>
    %23 = arith.addf %22, %21 : vector<16x32xf32>
    %24 = arith.divf %22, %23 : vector<16x32xf32>
    %25 = vector.extract_strided_slice %14 {offsets = [0, 32], sizes = [16, 32], strides = [1, 1]} : vector<16x96xf32> to vector<16x32xf32>
    %26 = arith.addf %25, %15 : vector<16x32xf32>
    %27 = vector.broadcast %8 : vector<1x32xf32> to vector<16x32xf32>
    %28 = arith.addf %26, %27 : vector<16x32xf32>
    %29 = arith.negf %28 : vector<16x32xf32>
    %30 = math.exp %29 : vector<16x32xf32>
    %cst_24 = arith.constant 1.000000e+00 : f32
    %31 = vector.broadcast %cst_24 : f32 to vector<16x32xf32>
    %32 = arith.addf %31, %30 : vector<16x32xf32>
    %33 = arith.divf %31, %32 : vector<16x32xf32>
    %34 = vector.extract_strided_slice %14 {offsets = [0, 64], sizes = [16, 32], strides = [1, 1]} : vector<16x96xf32> to vector<16x32xf32>
    %35 = arith.mulf %33, %0 : vector<16x32xf32>
    %cst_25 = arith.constant dense<0.000000e+00> : vector<16x32xf32>
    %36 = tpu.matmul %35, %6, %cst_25 {dimension_numbers = #tpu.dot_dimension_numbers<[1], [0], [0], [1], [0, 0, 1, 1], [], []>} : vector<16x32xf32>, vector<32x32xf32>, vector<16x32xf32> -> vector<16x32xf32>
    %37 = arith.addf %34, %36 : vector<16x32xf32>
    %38 = vector.broadcast %9 : vector<1x32xf32> to vector<16x32xf32>
    %39 = arith.addf %37, %38 : vector<16x32xf32>
    %40 = math.tanh %39 : vector<16x32xf32>
    %cst_26 = arith.constant 1.000000e+00 : f32
    %41 = vector.broadcast %cst_26 : f32 to vector<16x32xf32>
    %42 = arith.subf %41, %24 : vector<16x32xf32>
    %43 = arith.mulf %42, %0 : vector<16x32xf32>
    %44 = arith.mulf %24, %40 : vector<16x32xf32>
    %45 = arith.addf %43, %44 : vector<16x32xf32>
    %c1_i32 = arith.constant 1 : i32
    %cst_27 = arith.constant dense<0.000000e+00> : vector<16x32xf32>
    %46 = tpu.matmul %1, %45, %cst_27 {dimension_numbers = #tpu.dot_dimension_numbers<[1], [0], [0], [1], [0, 0, 1, 1], [], []>} : vector<16x16xf32>, vector<16x32xf32>, vector<16x32xf32> -> vector<16x32xf32>
    %cst_28 = arith.constant dense<0.000000e+00> : vector<16x32xf32>
    %47 = tpu.matmul %2, %45, %cst_28 {dimension_numbers = #tpu.dot_dimension_numbers<[1], [0], [0], [1], [0, 0, 1, 1], [], []>} : vector<16x16xf32>, vector<16x32xf32>, vector<16x32xf32> -> vector<16x32xf32>
    %cst_29 = arith.constant dense<0.000000e+00> : vector<16x96xf32>
    %48 = tpu.matmul %46, %3, %cst_29 {dimension_numbers = #tpu.dot_dimension_numbers<[1], [0], [0], [1], [0, 0, 1, 1], [], []>} : vector<16x32xf32>, vector<32x96xf32>, vector<16x96xf32> -> vector<16x96xf32>
    %cst_30 = arith.constant dense<0.000000e+00> : vector<16x96xf32>
    %49 = tpu.matmul %47, %4, %cst_30 {dimension_numbers = #tpu.dot_dimension_numbers<[1], [0], [0], [1], [0, 0, 1, 1], [], []>} : vector<16x32xf32>, vector<32x96xf32>, vector<16x96xf32> -> vector<16x96xf32>
    %50 = arith.addf %48, %49 : vector<16x96xf32>
    %cst_31 = arith.constant dense<0.000000e+00> : vector<16x32xf32>
    %51 = tpu.matmul %45, %5, %cst_31 {dimension_numbers = #tpu.dot_dimension_numbers<[1], [0], [0], [1], [0, 0, 1, 1], [], []>} : vector<16x32xf32>, vector<32x32xf32>, vector<16x32xf32> -> vector<16x32xf32>
    %52 = vector.extract_strided_slice %50 {offsets = [0, 0], sizes = [16, 32], strides = [1, 1]} : vector<16x96xf32> to vector<16x32xf32>
    %53 = arith.addf %52, %51 : vector<16x32xf32>
    %54 = vector.broadcast %7 : vector<1x32xf32> to vector<16x32xf32>
    %55 = arith.addf %53, %54 : vector<16x32xf32>
    %56 = arith.negf %55 : vector<16x32xf32>
    %57 = math.exp %56 : vector<16x32xf32>
    %cst_32 = arith.constant 1.000000e+00 : f32
    %58 = vector.broadcast %cst_32 : f32 to vector<16x32xf32>
    %59 = arith.addf %58, %57 : vector<16x32xf32>
    %60 = arith.divf %58, %59 : vector<16x32xf32>
    %61 = vector.extract_strided_slice %50 {offsets = [0, 32], sizes = [16, 32], strides = [1, 1]} : vector<16x96xf32> to vector<16x32xf32>
    %62 = arith.addf %61, %51 : vector<16x32xf32>
    %63 = vector.broadcast %8 : vector<1x32xf32> to vector<16x32xf32>
    %64 = arith.addf %62, %63 : vector<16x32xf32>
    %65 = arith.negf %64 : vector<16x32xf32>
    %66 = math.exp %65 : vector<16x32xf32>
    %cst_33 = arith.constant 1.000000e+00 : f32
    %67 = vector.broadcast %cst_33 : f32 to vector<16x32xf32>
    %68 = arith.addf %67, %66 : vector<16x32xf32>
    %69 = arith.divf %67, %68 : vector<16x32xf32>
    %70 = vector.extract_strided_slice %50 {offsets = [0, 64], sizes = [16, 32], strides = [1, 1]} : vector<16x96xf32> to vector<16x32xf32>
    %71 = arith.mulf %69, %45 : vector<16x32xf32>
    %cst_34 = arith.constant dense<0.000000e+00> : vector<16x32xf32>
    %72 = tpu.matmul %71, %6, %cst_34 {dimension_numbers = #tpu.dot_dimension_numbers<[1], [0], [0], [1], [0, 0, 1, 1], [], []>} : vector<16x32xf32>, vector<32x32xf32>, vector<16x32xf32> -> vector<16x32xf32>
    %73 = arith.addf %70, %72 : vector<16x32xf32>
    %74 = vector.broadcast %9 : vector<1x32xf32> to vector<16x32xf32>
    %75 = arith.addf %73, %74 : vector<16x32xf32>
    %76 = math.tanh %75 : vector<16x32xf32>
    %cst_35 = arith.constant 1.000000e+00 : f32
    %77 = vector.broadcast %cst_35 : f32 to vector<16x32xf32>
    %78 = arith.subf %77, %60 : vector<16x32xf32>
    %79 = arith.mulf %78, %45 : vector<16x32xf32>
    %80 = arith.mulf %60, %76 : vector<16x32xf32>
    %81 = arith.addf %79, %80 : vector<16x32xf32>
    %c2_i32 = arith.constant 2 : i32
    %cst_36 = arith.constant dense<0.000000e+00> : vector<16x32xf32>
    %82 = tpu.matmul %1, %81, %cst_36 {dimension_numbers = #tpu.dot_dimension_numbers<[1], [0], [0], [1], [0, 0, 1, 1], [], []>} : vector<16x16xf32>, vector<16x32xf32>, vector<16x32xf32> -> vector<16x32xf32>
    %cst_37 = arith.constant dense<0.000000e+00> : vector<16x32xf32>
    %83 = tpu.matmul %2, %81, %cst_37 {dimension_numbers = #tpu.dot_dimension_numbers<[1], [0], [0], [1], [0, 0, 1, 1], [], []>} : vector<16x16xf32>, vector<16x32xf32>, vector<16x32xf32> -> vector<16x32xf32>
    %cst_38 = arith.constant dense<0.000000e+00> : vector<16x96xf32>
    %84 = tpu.matmul %82, %3, %cst_38 {dimension_numbers = #tpu.dot_dimension_numbers<[1], [0], [0], [1], [0, 0, 1, 1], [], []>} : vector<16x32xf32>, vector<32x96xf32>, vector<16x96xf32> -> vector<16x96xf32>
    %cst_39 = arith.constant dense<0.000000e+00> : vector<16x96xf32>
    %85 = tpu.matmul %83, %4, %cst_39 {dimension_numbers = #tpu.dot_dimension_numbers<[1], [0], [0], [1], [0, 0, 1, 1], [], []>} : vector<16x32xf32>, vector<32x96xf32>, vector<16x96xf32> -> vector<16x96xf32>
    %86 = arith.addf %84, %85 : vector<16x96xf32>
    %cst_40 = arith.constant dense<0.000000e+00> : vector<16x32xf32>
    %87 = tpu.matmul %81, %5, %cst_40 {dimension_numbers = #tpu.dot_dimension_numbers<[1], [0], [0], [1], [0, 0, 1, 1], [], []>} : vector<16x32xf32>, vector<32x32xf32>, vector<16x32xf32> -> vector<16x32xf32>
    %88 = vector.extract_strided_slice %86 {offsets = [0, 0], sizes = [16, 32], strides = [1, 1]} : vector<16x96xf32> to vector<16x32xf32>
    %89 = arith.addf %88, %87 : vector<16x32xf32>
    %90 = vector.broadcast %7 : vector<1x32xf32> to vector<16x32xf32>
    %91 = arith.addf %89, %90 : vector<16x32xf32>
    %92 = arith.negf %91 : vector<16x32xf32>
    %93 = math.exp %92 : vector<16x32xf32>
    %cst_41 = arith.constant 1.000000e+00 : f32
    %94 = vector.broadcast %cst_41 : f32 to vector<16x32xf32>
    %95 = arith.addf %94, %93 : vector<16x32xf32>
    %96 = arith.divf %94, %95 : vector<16x32xf32>
    %97 = vector.extract_strided_slice %86 {offsets = [0, 32], sizes = [16, 32], strides = [1, 1]} : vector<16x96xf32> to vector<16x32xf32>
    %98 = arith.addf %97, %87 : vector<16x32xf32>
    %99 = vector.broadcast %8 : vector<1x32xf32> to vector<16x32xf32>
    %100 = arith.addf %98, %99 : vector<16x32xf32>
    %101 = arith.negf %100 : vector<16x32xf32>
    %102 = math.exp %101 : vector<16x32xf32>
    %cst_42 = arith.constant 1.000000e+00 : f32
    %103 = vector.broadcast %cst_42 : f32 to vector<16x32xf32>
    %104 = arith.addf %103, %102 : vector<16x32xf32>
    %105 = arith.divf %103, %104 : vector<16x32xf32>
    %106 = vector.extract_strided_slice %86 {offsets = [0, 64], sizes = [16, 32], strides = [1, 1]} : vector<16x96xf32> to vector<16x32xf32>
    %107 = arith.mulf %105, %81 : vector<16x32xf32>
    %cst_43 = arith.constant dense<0.000000e+00> : vector<16x32xf32>
    %108 = tpu.matmul %107, %6, %cst_43 {dimension_numbers = #tpu.dot_dimension_numbers<[1], [0], [0], [1], [0, 0, 1, 1], [], []>} : vector<16x32xf32>, vector<32x32xf32>, vector<16x32xf32> -> vector<16x32xf32>
    %109 = arith.addf %106, %108 : vector<16x32xf32>
    %110 = vector.broadcast %9 : vector<1x32xf32> to vector<16x32xf32>
    %111 = arith.addf %109, %110 : vector<16x32xf32>
    %112 = math.tanh %111 : vector<16x32xf32>
    %cst_44 = arith.constant 1.000000e+00 : f32
    %113 = vector.broadcast %cst_44 : f32 to vector<16x32xf32>
    %114 = arith.subf %113, %96 : vector<16x32xf32>
    %115 = arith.mulf %114, %81 : vector<16x32xf32>
    %116 = arith.mulf %96, %112 : vector<16x32xf32>
    %117 = arith.addf %115, %116 : vector<16x32xf32>
    %c0_45 = arith.constant 0 : index
    %c0_46 = arith.constant 0 : index
    %118 = vector.load %arg10[%c0_45, %c0_46] : memref<16x32xf32, #tpu.memory_space<vmem>>, vector<16x32xf32>
    tpu.vector_store %arg10[%c0_45, %c0_46], %117 {strides = array<i32>} : memref<16x32xf32, #tpu.memory_space<vmem>>, vector<16x32xf32>,
    return
  }
}

</mosaic_0001>

<llo_original>
// kernel: tpu_custom_call.1
$region0: #{tpu_custom_call.1}
  #allocation0 [shape = 'u32[]', space=smem, size = 0x4, offset = 0x4, fixed_abs, tag = 'smem constant byte address 0x4 - core index']
  #allocation1 [shape = 'u32[72,128]{1,0:T(1,128)}', space=vmem, size = 0x9000, scoped, tag = 'internal scratch']
  %s0 = inlined_call_operand.hbm [shape: f32[16,32], index: 0, kind: input, shape index: {}]
  %s1 = inlined_call_operand.hbm [shape: f32[16,16], index: 1, kind: input, shape index: {}]
  %s2 = inlined_call_operand.hbm [shape: f32[16,16], index: 2, kind: input, shape index: {}]
  %s3 = inlined_call_operand.hbm [shape: f32[32,96], index: 3, kind: input, shape index: {}]
  %s4 = inlined_call_operand.hbm [shape: f32[32,96], index: 4, kind: input, shape index: {}]
  %s5 = inlined_call_operand.hbm [shape: f32[32,32], index: 5, kind: input, shape index: {}]
  %s6 = inlined_call_operand.hbm [shape: f32[32,32], index: 6, kind: input, shape index: {}]
  %s7 = inlined_call_operand.vmem [shape: f32[1,32], index: 7, kind: input, shape index: {}]
  %s8 = inlined_call_operand.vmem [shape: f32[1,32], index: 8, kind: input, shape index: {}]
  %s9 = inlined_call_operand.vmem [shape: f32[1,32], index: 9, kind: input, shape index: {}]
  %s10 = inlined_call_operand.hbm [shape: f32[16,32], index: 10, kind: output, shape index: {}]
  %s11 = sld [smem:[#allocation0]]
  $region78: #{tpu_custom_call.1} parent=0
    _
  %s13 = ssub.s32 1, %s11
  %s14 = scalar_select 0, %s13, %s11
  $region1: #{tpu_custom_call.1} parent=0
    #allocation2 [shape = 'u8[8192]{0}', space=vmem, size = 0x2000, scoped, tag = 'input window, operand 0, single buffered']
    #allocation3 [shape = 's32[1]{0}', space=sflag, size = 0x4, scoped, tag = 'scoped memory for tpu_custom_call.1']
    #allocation4 [shape = 's32[1]{0}', space=sflag, size = 0x4, scoped, tag = 'scoped memory for tpu_custom_call.1']
    #allocation5 [shape = 'u8[8192]{0}', space=vmem, size = 0x2000, scoped, tag = 'input window, operand 1, single buffered']
    #allocation6 [shape = 's32[1]{0}', space=sflag, size = 0x4, scoped, tag = 'scoped memory for tpu_custom_call.1']
    #allocation7 [shape = 'u8[8192]{0}', space=vmem, size = 0x2000, scoped, tag = 'input window, operand 2, single buffered']
    #allocation8 [shape = 'u8[16384]{0}', space=vmem, size = 0x4000, scoped, tag = 'input window, operand 3, single buffered']
    #allocation9 [shape = 's32[1]{0}', space=sflag, size = 0x4, scoped, tag = 'scoped memory for tpu_custom_call.1']
    #allocation10 [shape = 'u8[16384]{0}', space=vmem, size = 0x4000, scoped, tag = 'input window, operand 4, single buffered']
    #allocation11 [shape = 'u8[16384]{0}', space=vmem, size = 0x4000, scoped, tag = 'input window, operand 5, single buffered']
    #allocation12 [shape = 's32[1]{0}', space=sflag, size = 0x4, scoped, tag = 'scoped memory for tpu_custom_call.1']
    #allocation13 [shape = 'u8[16384]{0}', space=vmem, size = 0x4000, scoped, tag = 'input window, operand 6, single buffered']
    #allocation14 [shape = 'u8[8192]{0}', space=vmem, size = 0x2000, scoped, tag = 'output window, operand 0, single buffered']
    %15 = vsyncpa [#allocation3], 0
    %16 = vsyncpa [#allocation6], 0
    %17 = vsyncpa [#allocation9], 0
    %18 = vsyncpa [#allocation12], 0
    %19 = vsyncpa [#allocation4], 0
    // Predicated region
    $region2: #{tpu_custom_call.1} parent=1 // pred_check
      _
    $region3: #{tpu_custom_call.1} parent=1 // pred_check_branch
      %21 = sbr.rel (0) target = $region5
    $region4: #{tpu_custom_call.1} parent=1 // pred_region
      %23 = vsyncadd [#allocation3], 0
      %s24 = sshll.u32 %s0, 4
      %s25 = int_to_ptr.hbm [resolvable:$true] %s24
      %s26 = sshll.u32 [#allocation2], 4
      %s27 = int_to_ptr.vmem [resolvable:$true] %s26
      %32 = dma.hbm_to_vmem [thread:$0]  %s25, 256, %s27, [#allocation3], 128, 128, 8
    $region5: #{tpu_custom_call.1} parent=1 // pred_fallthru
      _
    // Predicated region
    $region6: #{tpu_custom_call.1} parent=1 // pred_check
      _
    $region7: #{tpu_custom_call.1} parent=1 // pred_check_branch
      %34 = sbr.rel (0) target = $region9
    $region8: #{tpu_custom_call.1} parent=1 // pred_region
      %36 = vsyncadd [#allocation6], 0
      %s37 = sshll.u32 %s1, 4
      %s38 = int_to_ptr.hbm [resolvable:$true] %s37
      %s39 = sshll.u32 [#allocation5], 4
      %s40 = int_to_ptr.vmem [resolvable:$true] %s39
      %45 = dma.hbm_to_vmem [thread:$0]  %s38, 256, %s40, [#allocation6], 128, 128, 8
    $region9: #{tpu_custom_call.1} parent=1 // pred_fallthru
      _
    // Predicated region
    $region10: #{tpu_custom_call.1} parent=1 // pred_check
      _
    $region11: #{tpu_custom_call.1} parent=1 // pred_check_branch
      %47 = sbr.rel (0) target = $region13
    $region12: #{tpu_custom_call.1} parent=1 // pred_region
      %49 = vsyncadd [#allocation6], 0
      %s50 = sshll.u32 %s2, 4
      %s51 = int_to_ptr.hbm [resolvable:$true] %s50
      %s52 = sshll.u32 [#allocation7], 4
      %s53 = int_to_ptr.vmem [resolvable:$true] %s52
      %58 = dma.hbm_to_vmem [thread:$0]  %s51, 256, %s53, [#allocation6], 128, 128, 8
    $region13: #{tpu_custom_call.1} parent=1 // pred_fallthru
      _
    // Predicated region
    $region14: #{tpu_custom_call.1} parent=1 // pred_check
      _
    $region15: #{tpu_custom_call.1} parent=1 // pred_check_branch
      %60 = sbr.rel (0) target = $region17
    $region16: #{tpu_custom_call.1} parent=1 // pred_region
      %62 = vsyncadd [#allocation9], 0
      %s63 = sshll.u32 %s3, 4
      %s64 = int_to_ptr.hbm [resolvable:$true] %s63
      %s65 = sshll.u32 [#allocation8], 4
      %s66 = int_to_ptr.vmem [resolvable:$true] %s65
      %71 = dma.hbm_to_vmem [thread:$0]  %s64, 512, %s66, [#allocation9], 128, 128, 8
    $region17: #{tpu_custom_call.1} parent=1 // pred_fallthru
      _
    // Predicated region
    $region18: #{tpu_custom_call.1} parent=1 // pred_check
      _
    $region19: #{tpu_custom_call.1} parent=1 // pred_check_branch
      %73 = sbr.rel (0) target = $region21
    $region20: #{tpu_custom_call.1} parent=1 // pred_region
      %75 = vsyncadd [#allocation9], 0
      %s76 = sshll.u32 %s4, 4
      %s77 = int_to_ptr.hbm [resolvable:$true] %s76
      %s78 = sshll.u32 [#allocation10], 4
      %s79 = int_to_ptr.vmem [resolvable:$true] %s78
      %84 = dma.hbm_to_vmem [thread:$0]  %s77, 512, %s79, [#allocation9], 128, 128, 8
    $region21: #{tpu_custom_call.1} parent=1 // pred_fallthru
      _
    // Predicated region
    $region22: #{tpu_custom_call.1} parent=1 // pred_check
      _
    $region23: #{tpu_custom_call.1} parent=1 // pred_check_branch
      %86 = sbr.rel (0) target = $region25
    $region24: #{tpu_custom_call.1} parent=1 // pred_region
      %88 = vsyncadd [#allocation12], 0
      %s89 = sshll.u32 %s5, 4
      %s90 = int_to_ptr.hbm [resolvable:$true] %s89
      %s91 = sshll.u32 [#allocation11], 4
      %s92 = int_to_ptr.vmem [resolvable:$true] %s91
      %97 = dma.hbm_to_vmem [thread:$0]  %s90, 512, %s92, [#allocation12], 128, 128, 8
    $region25: #{tpu_custom_call.1} parent=1 // pred_fallthru
      _
    // Predicated region
    $region26: #{tpu_custom_call.1} parent=1 // pred_check
      _
    $region27: #{tpu_custom_call.1} parent=1 // pred_check_branch
      %99 = sbr.rel (0) target = $region29
    $region28: #{tpu_custom_call.1} parent=1 // pred_region
      %101 = vsyncadd [#allocation12], 0
      %s102 = sshll.u32 %s6, 4
      %s103 = int_to_ptr.hbm [resolvable:$true] %s102
      %s104 = sshll.u32 [#allocation13], 4
      %s105 = int_to_ptr.vmem [resolvable:$true] %s104
      %110 = dma.hbm_to_vmem [thread:$0]  %s103, 512, %s105, [#allocation12], 128, 128, 8
    $region29: #{tpu_custom_call.1} parent=1 // pred_fallthru
      _
    // Predicated region
    $region30: #{tpu_custom_call.1} parent=1 // pred_check
      _
    $region31: #{tpu_custom_call.1} parent=1 // pred_check_branch
      %112 = sbr.rel (0) target = $region33
    $region32: #{tpu_custom_call.1} parent=1 // pred_region
      _
    $region33: #{tpu_custom_call.1} parent=1 // pred_fallthru
      _
    // Predicated region
    $region34: #{tpu_custom_call.1} parent=1 // pred_check
      _
    $region35: #{tpu_custom_call.1} parent=1 // pred_check_branch
      %114 = sbr.rel (0) target = $region37
    $region36: #{tpu_custom_call.1} parent=1 // pred_region
      _
    $region37: #{tpu_custom_call.1} parent=1 // pred_fallthru
      _
    // Predicated region
    $region38: #{tpu_custom_call.1} parent=1 // pred_check
      _
    $region39: #{tpu_custom_call.1} parent=1 // pred_check_branch
      %116 = sbr.rel (0) target = $region41
    $region40: #{tpu_custom_call.1} parent=1 // pred_region
      _
    $region41: #{tpu_custom_call.1} parent=1 // pred_fallthru
      _
    // Predicated region
    $region42: #{tpu_custom_call.1} parent=1 // pred_check
      _
    $region43: #{tpu_custom_call.1} parent=1 // pred_check_branch
      %118 = sbr.rel (0) target = $region45
    $region44: #{tpu_custom_call.1} parent=1 // pred_region
      %120 = dma.done [#allocation3], 256
    $region45: #{tpu_custom_call.1} parent=1 // pred_fallthru
      _
    // Predicated region
    $region46: #{tpu_custom_call.1} parent=1 // pred_check
      _
    $region47: #{tpu_custom_call.1} parent=1 // pred_check_branch
      %122 = sbr.rel (0) target = $region49
    $region48: #{tpu_custom_call.1} parent=1 // pred_region
      %124 = dma.done [#allocation6], 256
    $region49: #{tpu_custom_call.1} parent=1 // pred_fallthru
      _
    // Predicated region
    $region50: #{tpu_custom_call.1} parent=1 // pred_check
      _
    $region51: #{tpu_custom_call.1} parent=1 // pred_check_branch
      %126 = sbr.rel (0) target = $region53
    $region52: #{tpu_custom_call.1} parent=1 // pred_region
      %128 = dma.done [#allocation6], 256
    $region53: #{tpu_custom_call.1} parent=1 // pred_fallthru
      _
    // Predicated region
    $region54: #{tpu_custom_call.1} parent=1 // pred_check
      _
    $region55: #{tpu_custom_call.1} parent=1 // pred_check_branch
      %130 = sbr.rel (0) target = $region57
    $region56: #{tpu_custom_call.1} parent=1 // pred_region
      %132 = dma.done [#allocation9], 512
    $region57: #{tpu_custom_call.1} parent=1 // pred_fallthru
      _
    // Predicated region
    $region58: #{tpu_custom_call.1} parent=1 // pred_check
      _
    $region59: #{tpu_custom_call.1} parent=1 // pred_check_branch
      %134 = sbr.rel (0) target = $region61
    $region60: #{tpu_custom_call.1} parent=1 // pred_region
      %136 = dma.done [#allocation9], 512
    $region61: #{tpu_custom_call.1} parent=1 // pred_fallthru
      _
    // Predicated region
    $region62: #{tpu_custom_call.1} parent=1 // pred_check
      _
    $region63: #{tpu_custom_call.1} parent=1 // pred_check_branch
      %138 = sbr.rel (0) target = $region65
    $region64: #{tpu_custom_call.1} parent=1 // pred_region
      %140 = dma.done [#allocation12], 512
    $region65: #{tpu_custom_call.1} parent=1 // pred_fallthru
      _
    // Predicated region
    $region66: #{tpu_custom_call.1} parent=1 // pred_check
      _
    $region67: #{tpu_custom_call.1} parent=1 // pred_check_branch
      %142 = sbr.rel (0) target = $region69
    $region68: #{tpu_custom_call.1} parent=1 // pred_region
      %144 = dma.done [#allocation12], 512
    $region69: #{tpu_custom_call.1} parent=1 // pred_fallthru
      _
    %v145 = vld [vmem:[#allocation2] sm:$0xff]
    %v146 = vld [vmem:[#allocation2 + $0x8] sm:$0xff]
    %v147 = vld [vmem:[#allocation5] sm:$0xff]
    %v148 = vld [vmem:[#allocation5 + $0x8] sm:$0xff]
    %v149 = vld [vmem:[#allocation7] sm:$0xff]
    %v150 = vld [vmem:[#allocation7 + $0x8] sm:$0xff]
    %v151 = vld [vmem:[#allocation8] sm:$0xff]
    %v152 = vld [vmem:[#allocation8 + $0x8] sm:$0xff]
    %v153 = vld [vmem:[#allocation8 + $0x10] sm:$0xff]
    %v154 = vld [vmem:[#allocation8 + $0x18] sm:$0xff]
    %v155 = vld [vmem:[#allocation10] sm:$0xff]
    %v156 = vld [vmem:[#allocation10 + $0x8] sm:$0xff]
    %v157 = vld [vmem:[#allocation10 + $0x10] sm:$0xff]
    %v158 = vld [vmem:[#allocation10 + $0x18] sm:$0xff]
    %v159 = vld [vmem:[#allocation11] sm:$0xff]
    %v160 = vld [vmem:[#allocation11 + $0x8] sm:$0xff]
    %v161 = vld [vmem:[#allocation11 + $0x10] sm:$0xff]
    %v162 = vld [vmem:[#allocation11 + $0x18] sm:$0xff]
    %v163 = vld [vmem:[#allocation13] sm:$0xff]
    %v164 = vld [vmem:[#allocation13 + $0x8] sm:$0xff]
    %v165 = vld [vmem:[#allocation13 + $0x10] sm:$0xff]
    %v166 = vld [vmem:[#allocation13 + $0x18] sm:$0xff]
    %v167 = vld [vmem:[%s7] sm:$0x1]
    %v168 = vld [vmem:[%s8] sm:$0x1]
    %v169 = vld [vmem:[%s9] sm:$0x1]
    %vm170 = vcmask 130048
    %v172 = vsel %vm170, %v147, 0
    %v175 = vsel %vm170, %v148, 0
    %177 = vmatpush.msra.mxu0 0.0
    %178 = vmatpush.msra.mxu0 0.0
    %179 = vmatpush.msra.mxu0 0.0
    %180 = vmatpush.msra.mxu0 0.0
    %181 = vmatpush.msra.mxu0 0.0
    %182 = vmatpush.msra.mxu0 0.0
    %183 = vmatpush.msra.mxu0 0.0
    %184 = vmatpush.msra.mxu0 0.0
    %185 = vmatpush.msra.mxu0 0.0
    %186 = vmatpush.msra.mxu0 0.0
    %187 = vmatpush.msra.mxu0 0.0
    %188 = vmatpush.msra.mxu0 0.0
    %189 = vmatpush.msra.mxu0 0.0
    %190 = vmatpush.msra.mxu0 0.0
    %191 = vmatpush.msra.mxu0 %v146
    %192 = vmatpush.msra.mxu0 %v145
    %193 = vmatmul.f32.gmra.mxu0 %v172
    %v194 = vpop.f32.mrf.mxu0
    %v195 = vadd.f32 0.0, %v194
    %196 = vmatmul.f32.gmra.mxu0 %v175
    %v197 = vpop.f32.mrf.mxu0
    %v198 = vadd.f32 0.0, %v197
    %199 = vdwg.mxu0
    %v201 = vsel %vm170, %v149, 0
    %v204 = vsel %vm170, %v150, 0
    %206 = vmatpush.msra.mxu0 0.0
    %207 = vmatpush.msra.mxu0 0.0
    %208 = vmatpush.msra.mxu0 0.0
    %209 = vmatpush.msra.mxu0 0.0
    %210 = vmatpush.msra.mxu0 0.0
    %211 = vmatpush.msra.mxu0 0.0
    %212 = vmatpush.msra.mxu0 0.0
    %213 = vmatpush.msra.mxu0 0.0
    %214 = vmatpush.msra.mxu0 0.0
    %215 = vmatpush.msra.mxu0 0.0
    %216 = vmatpush.msra.mxu0 0.0
    %217 = vmatpush.msra.mxu0 0.0
    %218 = vmatpush.msra.mxu0 0.0
    %219 = vmatpush.msra.mxu0 0.0
    %220 = vmatpush.msra.mxu0 %v146
    %221 = vmatpush.msra.mxu0 %v145
    %222 = vmatmul.f32.gmra.mxu0 %v201
    %v223 = vpop.f32.mrf.mxu0
    %v224 = vadd.f32 0.0, %v223
    %225 = vmatmul.f32.gmra.mxu0 %v204
    %v226 = vpop.f32.mrf.mxu0
    %v227 = vadd.f32 0.0, %v226
    %228 = vdwg.mxu0
    %vm229 = vcmask 261120
    %v231 = vsel %vm229, %v224, 0
    %v234 = vsel %vm229, %v227, 0
    %236 = vmatpush.msra.mxu0 0.0
    %237 = vmatpush.msra.mxu0 0.0
    %238 = vmatpush.msra.mxu0 0.0
    %239 = vmatpush.msra.mxu0 0.0
    %240 = vmatpush.msra.mxu0 0.0
    %241 = vmatpush.msra.mxu0 0.0
    %242 = vmatpush.msra.mxu0 0.0
    %243 = vmatpush.msra.mxu0 0.0
    %244 = vmatpush.msra.mxu0 0.0
    %245 = vmatpush.msra.mxu0 0.0
    %246 = vmatpush.msra.mxu0 0.0
    %247 = vmatpush.msra.mxu0 0.0
    %248 = vmatpush.msra.mxu0 %v158
    %249 = vmatpush.msra.mxu0 %v157
    %250 = vmatpush.msra.mxu0 %v156
    %251 = vmatpush.msra.mxu0 %v155
    %252 = vmatmul.f32.gmra.mxu0 %v231
    %v253 = vpop.f32.mrf.mxu0
    %v254 = vadd.f32 0.0, %v253
    %255 = vmatmul.f32.gmra.mxu0 %v234
    %v256 = vpop.f32.mrf.mxu0
    %v257 = vadd.f32 0.0, %v256
    %258 = vdwg.mxu0
    %v260 = vsel %vm229, %v195, 0
    %v263 = vsel %vm229, %v198, 0
    %265 = vmatpush.msra.mxu0 0.0
    %266 = vmatpush.msra.mxu0 0.0
    %267 = vmatpush.msra.mxu0 0.0
    %268 = vmatpush.msra.mxu0 0.0
    %269 = vmatpush.msra.mxu0 0.0
    %270 = vmatpush.msra.mxu0 0.0
    %271 = vmatpush.msra.mxu0 0.0
    %272 = vmatpush.msra.mxu0 0.0
    %273 = vmatpush.msra.mxu0 0.0
    %274 = vmatpush.msra.mxu0 0.0
    %275 = vmatpush.msra.mxu0 0.0
    %276 = vmatpush.msra.mxu0 0.0
    %277 = vmatpush.msra.mxu0 %v154
    %278 = vmatpush.msra.mxu0 %v153
    %279 = vmatpush.msra.mxu0 %v152
    %280 = vmatpush.msra.mxu0 %v151
    %281 = vmatmul.f32.gmra.mxu0 %v260
    %v282 = vpop.f32.mrf.mxu0
    %v283 = vadd.f32 %v254, %v282
    %284 = vmatmul.f32.gmra.mxu0 %v263
    %v285 = vpop.f32.mrf.mxu0
    %v286 = vadd.f32 %v257, %v285
    %287 = vdwg.mxu0
    %v289 = vsel %vm229, %v145, 0
    %v292 = vsel %vm229, %v146, 0
    %294 = vmatpush.msra.mxu0 0.0
    %295 = vmatpush.msra.mxu0 0.0
    %296 = vmatpush.msra.mxu0 0.0
    %297 = vmatpush.msra.mxu0 0.0
    %298 = vmatpush.msra.mxu0 0.0
    %299 = vmatpush.msra.mxu0 0.0
    %300 = vmatpush.msra.mxu0 0.0
    %301 = vmatpush.msra.mxu0 0.0
    %302 = vmatpush.msra.mxu0 0.0
    %303 = vmatpush.msra.mxu0 0.0
    %304 = vmatpush.msra.mxu0 0.0
    %305 = vmatpush.msra.mxu0 0.0
    %306 = vmatpush.msra.mxu0 %v162
    %307 = vmatpush.msra.mxu0 %v161
    %308 = vmatpush.msra.mxu0 %v160
    %309 = vmatpush.msra.mxu0 %v159
    %310 = vmatmul.f32.gmra.mxu0 %v289
    %v311 = vpop.f32.mrf.mxu0
    %v312 = vadd.f32 0.0, %v311
    %313 = vmatmul.f32.gmra.mxu0 %v292
    %v314 = vpop.f32.mrf.mxu0
    %v315 = vadd.f32 0.0, %v314
    %316 = vdwg.mxu0
    %v317 = vadd.f32 %v283, %v312
    %v318 = vadd.f32 %v286, %v315
    %v320 = vperm.slane %v167, 0
    %v322 = vadd.f32 %v317, %v320
    %v323 = vadd.f32 %v318, %v320
    %v324 = vxor.u32 %v322, 2147483648
    %v325 = vxor.u32 %v323, 2147483648
    %v326 = vmul.f32 %v324, 1.442695
    %v327 = vpow.pop %v326
    %v328 = vmul.f32 %v325, 1.442695
    %v329 = vpow.pop %v328
    %v330 = vadd.f32 %v327, 1.0
    %v331 = vadd.f32 %v329, 1.0
    %v332 = vrcp.pop %v330
    %v333 = vmul.f32 %v330, %v332
    %v334 = vsub.f32 1.0, %v333
    %v335 = vmul.f32 %v332, %v334
    %v336 = vadd.f32 %v332, %v335
    %vm337 = vweird.f32 %v330
    %vm338 = vweird.f32 %v332
    %vm339 = vmor %vm337, %vm338
    %v340 = vsel %vm339, %v332, %v336
    %v341 = vand.u32 2147483647, %v330
    %vm342 = vcmp.eq.f32.partialorder %v341, 8.507059e+37
    %v343 = vand.u32 %v330, 2147483648
    %v344 = vor.u32 1.1754944e-38, %v343
    %v345 = vsel %vm342, %v344, %v340
    %v346 = vmul.f32 1.0, %v345
    %v347 = vrcp.pop %v331
    %v348 = vmul.f32 %v331, %v347
    %v349 = vsub.f32 1.0, %v348
    %v350 = vmul.f32 %v347, %v349
    %v351 = vadd.f32 %v347, %v350
    %vm352 = vweird.f32 %v331
    %vm353 = vweird.f32 %v347
    %vm354 = vmor %vm352, %vm353
    %v355 = vsel %vm354, %v347, %v351
    %v356 = vand.u32 2147483647, %v331
    %vm357 = vcmp.eq.f32.partialorder %v356, 8.507059e+37
    %v358 = vand.u32 %v331, 2147483648
    %v359 = vor.u32 1.1754944e-38, %v358
    %v360 = vsel %vm357, %v359, %v355
    %v361 = vmul.f32 1.0, %v360
    %364 = vrot.lane.b32.xlu0 %v312, 32
    %v365 = vpop.permute.xlu0 %364
    %366 = vrot.lane.b32.xlu0 %v315, 32
    %v367 = vpop.permute.xlu0 %366
    %v370 = vadd.f32 %v283, %v365
    %v371 = vadd.f32 %v286, %v367
    %v373 = vperm.slane %v168, 0
    %374 = vrot.lane.b32.xlu0 %v373, 32
    %v375 = vpop.permute.xlu0 %374
    %v377 = vadd.f32 %v370, %v375
    %v378 = vadd.f32 %v371, %v375
    %v379 = vxor.u32 %v377, 2147483648
    %v380 = vxor.u32 %v378, 2147483648
    %v381 = vmul.f32 %v379, 1.442695
    %v382 = vpow.pop %v381
    %v383 = vmul.f32 %v380, 1.442695
    %v384 = vpow.pop %v383
    %v385 = vadd.f32 %v382, 1.0
    %v386 = vadd.f32 %v384, 1.0
    %v387 = vrcp.pop %v385
    %v388 = vmul.f32 %v385, %v387
    %v389 = vsub.f32 1.0, %v388
    %v390 = vmul.f32 %v387, %v389
    %v391 = vadd.f32 %v387, %v390
    %vm392 = vweird.f32 %v385
    %vm393 = vweird.f32 %v387
    %vm394 = vmor %vm392, %vm393
    %v395 = vsel %vm394, %v387, %v391
    %v396 = vand.u32 2147483647, %v385
    %vm397 = vcmp.eq.f32.partialorder %v396, 8.507059e+37
    %v398 = vand.u32 %v385, 2147483648
    %v399 = vor.u32 1.1754944e-38, %v398
    %v400 = vsel %vm397, %v399, %v395
    %v401 = vmul.f32 1.0, %v400
    %v402 = vrcp.pop %v386
    %v403 = vmul.f32 %v386, %v402
    %v404 = vsub.f32 1.0, %v403
    %v405 = vmul.f32 %v402, %v404
    %v406 = vadd.f32 %v402, %v405
    %vm407 = vweird.f32 %v386
    %vm408 = vweird.f32 %v402
    %vm409 = vmor %vm407, %vm408
    %v410 = vsel %vm409, %v402, %v406
    %v411 = vand.u32 2147483647, %v386
    %vm412 = vcmp.eq.f32.partialorder %v411, 8.507059e+37
    %v413 = vand.u32 %v386, 2147483648
    %v414 = vor.u32 1.1754944e-38, %v413
    %v415 = vsel %vm412, %v414, %v410
    %v416 = vmul.f32 1.0, %v415
    %417 = vrot.lane.b32.xlu0 %v145, 32
    %v418 = vpop.permute.xlu0 %417
    %419 = vrot.lane.b32.xlu0 %v146, 32
    %v420 = vpop.permute.xlu0 %419
    %v423 = vmul.f32 %v401, %v418
    %v424 = vmul.f32 %v416, %v420
    %427 = vrot.lane.b32.xlu0 %v423, 96
    %v428 = vpop.permute.xlu0 %427
    %429 = vrot.lane.b32.xlu0 %v424, 96
    %v430 = vpop.permute.xlu0 %429
    %v431 = vsel %vm229, %v428, 0
    %v433 = vsel %vm229, %v430, 0
    %435 = vmatpush.msra.mxu0 0.0
    %436 = vmatpush.msra.mxu0 0.0
    %437 = vmatpush.msra.mxu0 0.0
    %438 = vmatpush.msra.mxu0 0.0
    %439 = vmatpush.msra.mxu0 0.0
    %440 = vmatpush.msra.mxu0 0.0
    %441 = vmatpush.msra.mxu0 0.0
    %442 = vmatpush.msra.mxu0 0.0
    %443 = vmatpush.msra.mxu0 0.0
    %444 = vmatpush.msra.mxu0 0.0
    %445 = vmatpush.msra.mxu0 0.0
    %446 = vmatpush.msra.mxu0 0.0
    %447 = vmatpush.msra.mxu0 %v166
    %448 = vmatpush.msra.mxu0 %v165
    %449 = vmatpush.msra.mxu0 %v164
    %450 = vmatpush.msra.mxu0 %v163
    %451 = vmatmul.f32.gmra.mxu0 %v431
    %v452 = vpop.f32.mrf.mxu0
    %v453 = vadd.f32 0.0, %v452
    %454 = vmatmul.f32.gmra.mxu0 %v433
    %v455 = vpop.f32.mrf.mxu0
    %v456 = vadd.f32 0.0, %v455
    %457 = vdwg.mxu0
    %460 = vrot.lane.b32.xlu0 %v453, 64
    %v461 = vpop.permute.xlu0 %460
    %462 = vrot.lane.b32.xlu0 %v456, 64
    %v463 = vpop.permute.xlu0 %462
    %v466 = vadd.f32 %v283, %v461
    %v467 = vadd.f32 %v286, %v463
    %v469 = vperm.slane %v169, 0
    %470 = vrot.lane.b32.xlu0 %v469, 64
    %v471 = vpop.permute.xlu0 %470
    %v473 = vadd.f32 %v466, %v471
    %v474 = vadd.f32 %v467, %v471
    %v475 = vtanh.pop %v473
    %v476 = vtanh.pop %v474
    %v477 = vsub.f32 1.0, %v346
    %v478 = vsub.f32 1.0, %v361
    %v479 = vmul.f32 %v477, %v145
    %v480 = vmul.f32 %v478, %v146
    %483 = vrot.lane.b32.xlu0 %v475, 64
    %v484 = vpop.permute.xlu0 %483
    %485 = vrot.lane.b32.xlu0 %v476, 64
    %v486 = vpop.permute.xlu0 %485
    %v489 = vmul.f32 %v346, %v484
    %v490 = vmul.f32 %v361, %v486
    %v491 = vadd.f32 %v479, %v489
    %v492 = vadd.f32 %v480, %v490
    %493 = vmatpush.msra.mxu0 0.0
    %494 = vmatpush.msra.mxu0 0.0
    %495 = vmatpush.msra.mxu0 0.0
    %496 = vmatpush.msra.mxu0 0.0
    %497 = vmatpush.msra.mxu0 0.0
    %498 = vmatpush.msra.mxu0 0.0
    %499 = vmatpush.msra.mxu0 0.0
    %500 = vmatpush.msra.mxu0 0.0
    %501 = vmatpush.msra.mxu0 0.0
    %502 = vmatpush.msra.mxu0 0.0
    %503 = vmatpush.msra.mxu0 0.0
    %504 = vmatpush.msra.mxu0 0.0
    %505 = vmatpush.msra.mxu0 0.0
    %506 = vmatpush.msra.mxu0 0.0
    %507 = vmatpush.msra.mxu0 %v492
    %508 = vmatpush.msra.mxu0 %v491
    %509 = vmatmul.f32.gmra.mxu0 %v172
    %v510 = vpop.f32.mrf.mxu0
    %v511 = vadd.f32 0.0, %v510
    %512 = vmatmul.f32.gmra.mxu0 %v175
    %v513 = vpop.f32.mrf.mxu0
    %v514 = vadd.f32 0.0, %v513
    %515 = vdwg.mxu0
    %516 = vmatpush.msra.mxu0 0.0
    %517 = vmatpush.msra.mxu0 0.0
    %518 = vmatpush.msra.mxu0 0.0
    %519 = vmatpush.msra.mxu0 0.0
    %520 = vmatpush.msra.mxu0 0.0
    %521 = vmatpush.msra.mxu0 0.0
    %522 = vmatpush.msra.mxu0 0.0
    %523 = vmatpush.msra.mxu0 0.0
    %524 = vmatpush.msra.mxu0 0.0
    %525 = vmatpush.msra.mxu0 0.0
    %526 = vmatpush.msra.mxu0 0.0
    %527 = vmatpush.msra.mxu0 0.0
    %528 = vmatpush.msra.mxu0 0.0
    %529 = vmatpush.msra.mxu0 0.0
    %530 = vmatpush.msra.mxu0 %v492
    %531 = vmatpush.msra.mxu0 %v491
    %532 = vmatmul.f32.gmra.mxu0 %v201
    %v533 = vpop.f32.mrf.mxu0
    %v534 = vadd.f32 0.0, %v533
    %535 = vmatmul.f32.gmra.mxu0 %v204
    %v536 = vpop.f32.mrf.mxu0
    %v537 = vadd.f32 0.0, %v536
    %538 = vdwg.mxu0
    %v540 = vsel %vm229, %v534, 0
    %v543 = vsel %vm229, %v537, 0
    %545 = vmatpush.msra.mxu0 0.0
    %546 = vmatpush.msra.mxu0 0.0
    %547 = vmatpush.msra.mxu0 0.0
    %548 = vmatpush.msra.mxu0 0.0
    %549 = vmatpush.msra.mxu0 0.0
    %550 = vmatpush.msra.mxu0 0.0
    %551 = vmatpush.msra.mxu0 0.0
    %552 = vmatpush.msra.mxu0 0.0
    %553 = vmatpush.msra.mxu0 0.0
    %554 = vmatpush.msra.mxu0 0.0
    %555 = vmatpush.msra.mxu0 0.0
    %556 = vmatpush.msra.mxu0 0.0
    %557 = vmatpush.msra.mxu0 %v158
    %558 = vmatpush.msra.mxu0 %v157
    %559 = vmatpush.msra.mxu0 %v156
    %560 = vmatpush.msra.mxu0 %v155
    %561 = vmatmul.f32.gmra.mxu0 %v540
    %v562 = vpop.f32.mrf.mxu0
    %v563 = vadd.f32 0.0, %v562
    %564 = vmatmul.f32.gmra.mxu0 %v543
    %v565 = vpop.f32.mrf.mxu0
    %v566 = vadd.f32 0.0, %v565
    %567 = vdwg.mxu0
    %v569 = vsel %vm229, %v511, 0
    %v572 = vsel %vm229, %v514, 0
    %574 = vmatpush.msra.mxu0 0.0
    %575 = vmatpush.msra.mxu0 0.0
    %576 = vmatpush.msra.mxu0 0.0
    %577 = vmatpush.msra.mxu0 0.0
    %578 = vmatpush.msra.mxu0 0.0
    %579 = vmatpush.msra.mxu0 0.0
    %580 = vmatpush.msra.mxu0 0.0
    %581 = vmatpush.msra.mxu0 0.0
    %582 = vmatpush.msra.mxu0 0.0
    %583 = vmatpush.msra.mxu0 0.0
    %584 = vmatpush.msra.mxu0 0.0
    %585 = vmatpush.msra.mxu0 0.0
    %586 = vmatpush.msra.mxu0 %v154
    %587 = vmatpush.msra.mxu0 %v153
    %588 = vmatpush.msra.mxu0 %v152
    %589 = vmatpush.msra.mxu0 %v151
    %590 = vmatmul.f32.gmra.mxu0 %v569
    %v591 = vpop.f32.mrf.mxu0
    %v592 = vadd.f32 %v563, %v591
    %593 = vmatmul.f32.gmra.mxu0 %v572
    %v594 = vpop.f32.mrf.mxu0
    %v595 = vadd.f32 %v566, %v594
    %596 = vdwg.mxu0
    %v598 = vsel %vm229, %v491, 0
    %v601 = vsel %vm229, %v492, 0
    %603 = vmatpush.msra.mxu0 0.0
    %604 = vmatpush.msra.mxu0 0.0
    %605 = vmatpush.msra.mxu0 0.0
    %606 = vmatpush.msra.mxu0 0.0
    %607 = vmatpush.msra.mxu0 0.0
    %608 = vmatpush.msra.mxu0 0.0
    %609 = vmatpush.msra.mxu0 0.0
    %610 = vmatpush.msra.mxu0 0.0
    %611 = vmatpush.msra.mxu0 0.0
    %612 = vmatpush.msra.mxu0 0.0
    %613 = vmatpush.msra.mxu0 0.0
    %614 = vmatpush.msra.mxu0 0.0
    %615 = vmatpush.msra.mxu0 %v162
    %616 = vmatpush.msra.mxu0 %v161
    %617 = vmatpush.msra.mxu0 %v160
    %618 = vmatpush.msra.mxu0 %v159
    %619 = vmatmul.f32.gmra.mxu0 %v598
    %v620 = vpop.f32.mrf.mxu0
    %v621 = vadd.f32 0.0, %v620
    %622 = vmatmul.f32.gmra.mxu0 %v601
    %v623 = vpop.f32.mrf.mxu0
    %v624 = vadd.f32 0.0, %v623
    %625 = vdwg.mxu0
    %v626 = vadd.f32 %v592, %v621
    %v627 = vadd.f32 %v595, %v624
    %v628 = vadd.f32 %v626, %v320
    %v629 = vadd.f32 %v627, %v320
    %v630 = vxor.u32 %v628, 2147483648
    %v631 = vxor.u32 %v629, 2147483648
    %v632 = vmul.f32 %v630, 1.442695
    %v633 = vpow.pop %v632
    %v634 = vmul.f32 %v631, 1.442695
    %v635 = vpow.pop %v634
    %v636 = vadd.f32 %v633, 1.0
    %v637 = vadd.f32 %v635, 1.0
    %v638 = vrcp.pop %v636
    %v639 = vmul.f32 %v636, %v638
    %v640 = vsub.f32 1.0, %v639
    %v641 = vmul.f32 %v638, %v640
    %v642 = vadd.f32 %v638, %v641
    %vm643 = vweird.f32 %v636
    %vm644 = vweird.f32 %v638
    %vm645 = vmor %vm643, %vm644
    %v646 = vsel %vm645, %v638, %v642
    %v647 = vand.u32 2147483647, %v636
    %vm648 = vcmp.eq.f32.partialorder %v647, 8.507059e+37
    %v649 = vand.u32 %v636, 2147483648
    %v650 = vor.u32 1.1754944e-38, %v649
    %v651 = vsel %vm648, %v650, %v646
    %v652 = vmul.f32 1.0, %v651
    %v653 = vrcp.pop %v637
    %v654 = vmul.f32 %v637, %v653
    %v655 = vsub.f32 1.0, %v654
    %v656 = vmul.f32 %v653, %v655
    %v657 = vadd.f32 %v653, %v656
    %vm658 = vweird.f32 %v637
    %vm659 = vweird.f32 %v653
    %vm660 = vmor %vm658, %vm659
    %v661 = vsel %vm660, %v653, %v657
    %v662 = vand.u32 2147483647, %v637
    %vm663 = vcmp.eq.f32.partialorder %v662, 8.507059e+37
    %v664 = vand.u32 %v637, 2147483648
    %v665 = vor.u32 1.1754944e-38, %v664
    %v666 = vsel %vm663, %v665, %v661
    %v667 = vmul.f32 1.0, %v666
    %670 = vrot.lane.b32.xlu0 %v621, 32
    %v671 = vpop.permute.xlu0 %670
    %672 = vrot.lane.b32.xlu0 %v624, 32
    %v673 = vpop.permute.xlu0 %672
    %v676 = vadd.f32 %v592, %v671
    %v677 = vadd.f32 %v595, %v673
    %v678 = vadd.f32 %v676, %v375
    %v679 = vadd.f32 %v677, %v375
    %v680 = vxor.u32 %v678, 2147483648
    %v681 = vxor.u32 %v679, 2147483648
    %v682 = vmul.f32 %v680, 1.442695
    %v683 = vpow.pop %v682
    %v684 = vmul.f32 %v681, 1.442695
    %v685 = vpow.pop %v684
    %v686 = vadd.f32 %v683, 1.0
    %v687 = vadd.f32 %v685, 1.0
    %v688 = vrcp.pop %v686
    %v689 = vmul.f32 %v686, %v688
    %v690 = vsub.f32 1.0, %v689
    %v691 = vmul.f32 %v688, %v690
    %v692 = vadd.f32 %v688, %v691
    %vm693 = vweird.f32 %v686
    %vm694 = vweird.f32 %v688
    %vm695 = vmor %vm693, %vm694
    %v696 = vsel %vm695, %v688, %v692
    %v697 = vand.u32 2147483647, %v686
    %vm698 = vcmp.eq.f32.partialorder %v697, 8.507059e+37
    %v699 = vand.u32 %v686, 2147483648
    %v700 = vor.u32 1.1754944e-38, %v699
    %v701 = vsel %vm698, %v700, %v696
    %v702 = vmul.f32 1.0, %v701
    %v703 = vrcp.pop %v687
    %v704 = vmul.f32 %v687, %v703
    %v705 = vsub.f32 1.0, %v704
    %v706 = vmul.f32 %v703, %v705
    %v707 = vadd.f32 %v703, %v706
    %vm708 = vweird.f32 %v687
    %vm709 = vweird.f32 %v703
    %vm710 = vmor %vm708, %vm709
    %v711 = vsel %vm710, %v703, %v707
    %v712 = vand.u32 2147483647, %v687
    %vm713 = vcmp.eq.f32.partialorder %v712, 8.507059e+37
    %v714 = vand.u32 %v687, 2147483648
    %v715 = vor.u32 1.1754944e-38, %v714
    %v716 = vsel %vm713, %v715, %v711
    %v717 = vmul.f32 1.0, %v716
    %718 = vrot.lane.b32.xlu0 %v491, 32
    %v719 = vpop.permute.xlu0 %718
    %720 = vrot.lane.b32.xlu0 %v492, 32
    %v721 = vpop.permute.xlu0 %720
    %v724 = vmul.f32 %v702, %v719
    %v725 = vmul.f32 %v717, %v721
    %728 = vrot.lane.b32.xlu0 %v724, 96
    %v729 = vpop.permute.xlu0 %728
    %730 = vrot.lane.b32.xlu0 %v725, 96
    %v731 = vpop.permute.xlu0 %730
    %v732 = vsel %vm229, %v729, 0
    %v734 = vsel %vm229, %v731, 0
    %736 = vmatpush.msra.mxu0 0.0
    %737 = vmatpush.msra.mxu0 0.0
    %738 = vmatpush.msra.mxu0 0.0
    %739 = vmatpush.msra.mxu0 0.0
    %740 = vmatpush.msra.mxu0 0.0
    %741 = vmatpush.msra.mxu0 0.0
    %742 = vmatpush.msra.mxu0 0.0
    %743 = vmatpush.msra.mxu0 0.0
    %744 = vmatpush.msra.mxu0 0.0
    %745 = vmatpush.msra.mxu0 0.0
    %746 = vmatpush.msra.mxu0 0.0
    %747 = vmatpush.msra.mxu0 0.0
    %748 = vmatpush.msra.mxu0 %v166
    %749 = vmatpush.msra.mxu0 %v165
    %750 = vmatpush.msra.mxu0 %v164
    %751 = vmatpush.msra.mxu0 %v163
    %752 = vmatmul.f32.gmra.mxu0 %v732
    %v753 = vpop.f32.mrf.mxu0
    %v754 = vadd.f32 0.0, %v753
    %755 = vmatmul.f32.gmra.mxu0 %v734
    %v756 = vpop.f32.mrf.mxu0
    %v757 = vadd.f32 0.0, %v756
    %758 = vdwg.mxu0
    %761 = vrot.lane.b32.xlu0 %v754, 64
    %v762 = vpop.permute.xlu0 %761
    %763 = vrot.lane.b32.xlu0 %v757, 64
    %v764 = vpop.permute.xlu0 %763
    %v767 = vadd.f32 %v592, %v762
    %v768 = vadd.f32 %v595, %v764
    %v769 = vadd.f32 %v767, %v471
    %v770 = vadd.f32 %v768, %v471
    %v771 = vtanh.pop %v769
    %v772 = vtanh.pop %v770
    %v773 = vsub.f32 1.0, %v652
    %v774 = vsub.f32 1.0, %v667
    %v775 = vmul.f32 %v773, %v491
    %v776 = vmul.f32 %v774, %v492
    %779 = vrot.lane.b32.xlu0 %v771, 64
    %v780 = vpop.permute.xlu0 %779
    %781 = vrot.lane.b32.xlu0 %v772, 64
    %v782 = vpop.permute.xlu0 %781
    %v785 = vmul.f32 %v652, %v780
    %v786 = vmul.f32 %v667, %v782
    %v787 = vadd.f32 %v775, %v785
    %v788 = vadd.f32 %v776, %v786
    %789 = vmatpush.msra.mxu0 0.0
    %790 = vmatpush.msra.mxu0 0.0
    %791 = vmatpush.msra.mxu0 0.0
    %792 = vmatpush.msra.mxu0 0.0
    %793 = vmatpush.msra.mxu0 0.0
    %794 = vmatpush.msra.mxu0 0.0
    %795 = vmatpush.msra.mxu0 0.0
    %796 = vmatpush.msra.mxu0 0.0
    %797 = vmatpush.msra.mxu0 0.0
    %798 = vmatpush.msra.mxu0 0.0
    %799 = vmatpush.msra.mxu0 0.0
    %800 = vmatpush.msra.mxu0 0.0
    %801 = vmatpush.msra.mxu0 0.0
    %802 = vmatpush.msra.mxu0 0.0
    %803 = vmatpush.msra.mxu0 %v788
    %804 = vmatpush.msra.mxu0 %v787
    %805 = vmatmul.f32.gmra.mxu0 %v172
    %v806 = vpop.f32.mrf.mxu0
    %v807 = vadd.f32 0.0, %v806
    %808 = vmatmul.f32.gmra.mxu0 %v175
    %v809 = vpop.f32.mrf.mxu0
    %v810 = vadd.f32 0.0, %v809
    %811 = vdwg.mxu0
    %812 = vmatpush.msra.mxu0 0.0
    %813 = vmatpush.msra.mxu0 0.0
    %814 = vmatpush.msra.mxu0 0.0
    %815 = vmatpush.msra.mxu0 0.0
    %816 = vmatpush.msra.mxu0 0.0
    %817 = vmatpush.msra.mxu0 0.0
    %818 = vmatpush.msra.mxu0 0.0
    %819 = vmatpush.msra.mxu0 0.0
    %820 = vmatpush.msra.mxu0 0.0
    %821 = vmatpush.msra.mxu0 0.0
    %822 = vmatpush.msra.mxu0 0.0
    %823 = vmatpush.msra.mxu0 0.0
    %824 = vmatpush.msra.mxu0 0.0
    %825 = vmatpush.msra.mxu0 0.0
    %826 = vmatpush.msra.mxu0 %v788
    %827 = vmatpush.msra.mxu0 %v787
    %828 = vmatmul.f32.gmra.mxu0 %v201
    %v829 = vpop.f32.mrf.mxu0
    %v830 = vadd.f32 0.0, %v829
    %831 = vmatmul.f32.gmra.mxu0 %v204
    %v832 = vpop.f32.mrf.mxu0
    %v833 = vadd.f32 0.0, %v832
    %834 = vdwg.mxu0
    %v836 = vsel %vm229, %v830, 0
    %v839 = vsel %vm229, %v833, 0
    %841 = vmatpush.msra.mxu0 0.0
    %842 = vmatpush.msra.mxu0 0.0
    %843 = vmatpush.msra.mxu0 0.0
    %844 = vmatpush.msra.mxu0 0.0
    %845 = vmatpush.msra.mxu0 0.0
    %846 = vmatpush.msra.mxu0 0.0
    %847 = vmatpush.msra.mxu0 0.0
    %848 = vmatpush.msra.mxu0 0.0
    %849 = vmatpush.msra.mxu0 0.0
    %850 = vmatpush.msra.mxu0 0.0
    %851 = vmatpush.msra.mxu0 0.0
    %852 = vmatpush.msra.mxu0 0.0
    %853 = vmatpush.msra.mxu0 %v158
    %854 = vmatpush.msra.mxu0 %v157
    %855 = vmatpush.msra.mxu0 %v156
    %856 = vmatpush.msra.mxu0 %v155
    %857 = vmatmul.f32.gmra.mxu0 %v836
    %v858 = vpop.f32.mrf.mxu0
    %v859 = vadd.f32 0.0, %v858
    %860 = vmatmul.f32.gmra.mxu0 %v839
    %v861 = vpop.f32.mrf.mxu0
    %v862 = vadd.f32 0.0, %v861
    %863 = vdwg.mxu0
    %v865 = vsel %vm229, %v807, 0
    %v868 = vsel %vm229, %v810, 0
    %870 = vmatpush.msra.mxu0 0.0
    %871 = vmatpush.msra.mxu0 0.0
    %872 = vmatpush.msra.mxu0 0.0
    %873 = vmatpush.msra.mxu0 0.0
    %874 = vmatpush.msra.mxu0 0.0
    %875 = vmatpush.msra.mxu0 0.0
    %876 = vmatpush.msra.mxu0 0.0
    %877 = vmatpush.msra.mxu0 0.0
    %878 = vmatpush.msra.mxu0 0.0
    %879 = vmatpush.msra.mxu0 0.0
    %880 = vmatpush.msra.mxu0 0.0
    %881 = vmatpush.msra.mxu0 0.0
    %882 = vmatpush.msra.mxu0 %v154
    %883 = vmatpush.msra.mxu0 %v153
    %884 = vmatpush.msra.mxu0 %v152
    %885 = vmatpush.msra.mxu0 %v151
    %886 = vmatmul.f32.gmra.mxu0 %v865
    %v887 = vpop.f32.mrf.mxu0
    %v888 = vadd.f32 %v859, %v887
    %889 = vmatmul.f32.gmra.mxu0 %v868
    %v890 = vpop.f32.mrf.mxu0
    %v891 = vadd.f32 %v862, %v890
    %892 = vdwg.mxu0
    %v894 = vsel %vm229, %v787, 0
    %v897 = vsel %vm229, %v788, 0
    %899 = vmatpush.msra.mxu0 0.0
    %900 = vmatpush.msra.mxu0 0.0
    %901 = vmatpush.msra.mxu0 0.0
    %902 = vmatpush.msra.mxu0 0.0
    %903 = vmatpush.msra.mxu0 0.0
    %904 = vmatpush.msra.mxu0 0.0
    %905 = vmatpush.msra.mxu0 0.0
    %906 = vmatpush.msra.mxu0 0.0
    %907 = vmatpush.msra.mxu0 0.0
    %908 = vmatpush.msra.mxu0 0.0
    %909 = vmatpush.msra.mxu0 0.0
    %910 = vmatpush.msra.mxu0 0.0
    %911 = vmatpush.msra.mxu0 %v162
    %912 = vmatpush.msra.mxu0 %v161
    %913 = vmatpush.msra.mxu0 %v160
    %914 = vmatpush.msra.mxu0 %v159
    %915 = vmatmul.f32.gmra.mxu0 %v894
    %v916 = vpop.f32.mrf.mxu0
    %v917 = vadd.f32 0.0, %v916
    %918 = vmatmul.f32.gmra.mxu0 %v897
    %v919 = vpop.f32.mrf.mxu0
    %v920 = vadd.f32 0.0, %v919
    %921 = vdwg.mxu0
    %v922 = vadd.f32 %v888, %v917
    %v923 = vadd.f32 %v891, %v920
    %v924 = vadd.f32 %v922, %v320
    %v925 = vadd.f32 %v923, %v320
    %v926 = vxor.u32 %v924, 2147483648
    %v927 = vxor.u32 %v925, 2147483648
    %v928 = vmul.f32 %v926, 1.442695
    %v929 = vpow.pop %v928
    %v930 = vmul.f32 %v927, 1.442695
    %v931 = vpow.pop %v930
    %v932 = vadd.f32 %v929, 1.0
    %v933 = vadd.f32 %v931, 1.0
    %v934 = vrcp.pop %v932
    %v935 = vmul.f32 %v932, %v934
    %v936 = vsub.f32 1.0, %v935
    %v937 = vmul.f32 %v934, %v936
    %v938 = vadd.f32 %v934, %v937
    %vm939 = vweird.f32 %v932
    %vm940 = vweird.f32 %v934
    %vm941 = vmor %vm939, %vm940
    %v942 = vsel %vm941, %v934, %v938
    %v943 = vand.u32 2147483647, %v932
    %vm944 = vcmp.eq.f32.partialorder %v943, 8.507059e+37
    %v945 = vand.u32 %v932, 2147483648
    %v946 = vor.u32 1.1754944e-38, %v945
    %v947 = vsel %vm944, %v946, %v942
    %v948 = vmul.f32 1.0, %v947
    %v949 = vrcp.pop %v933
    %v950 = vmul.f32 %v933, %v949
    %v951 = vsub.f32 1.0, %v950
    %v952 = vmul.f32 %v949, %v951
    %v953 = vadd.f32 %v949, %v952
    %vm954 = vweird.f32 %v933
    %vm955 = vweird.f32 %v949
    %vm956 = vmor %vm954, %vm955
    %v957 = vsel %vm956, %v949, %v953
    %v958 = vand.u32 2147483647, %v933
    %vm959 = vcmp.eq.f32.partialorder %v958, 8.507059e+37
    %v960 = vand.u32 %v933, 2147483648
    %v961 = vor.u32 1.1754944e-38, %v960
    %v962 = vsel %vm959, %v961, %v957
    %v963 = vmul.f32 1.0, %v962
    %966 = vrot.lane.b32.xlu0 %v917, 32
    %v967 = vpop.permute.xlu0 %966
    %968 = vrot.lane.b32.xlu0 %v920, 32
    %v969 = vpop.permute.xlu0 %968
    %v972 = vadd.f32 %v888, %v967
    %v973 = vadd.f32 %v891, %v969
    %v974 = vadd.f32 %v972, %v375
    %v975 = vadd.f32 %v973, %v375
    %v976 = vxor.u32 %v974, 2147483648
    %v977 = vxor.u32 %v975, 2147483648
    %v978 = vmul.f32 %v976, 1.442695
    %v979 = vpow.pop %v978
    %v980 = vmul.f32 %v977, 1.442695
    %v981 = vpow.pop %v980
    %v982 = vadd.f32 %v979, 1.0
    %v983 = vadd.f32 %v981, 1.0
    %v984 = vrcp.pop %v982
    %v985 = vmul.f32 %v982, %v984
    %v986 = vsub.f32 1.0, %v985
    %v987 = vmul.f32 %v984, %v986
    %v988 = vadd.f32 %v984, %v987
    %vm989 = vweird.f32 %v982
    %vm990 = vweird.f32 %v984
    %vm991 = vmor %vm989, %vm990
    %v992 = vsel %vm991, %v984, %v988
    %v993 = vand.u32 2147483647, %v982
    %vm994 = vcmp.eq.f32.partialorder %v993, 8.507059e+37
    %v995 = vand.u32 %v982, 2147483648
    %v996 = vor.u32 1.1754944e-38, %v995
    %v997 = vsel %vm994, %v996, %v992
    %v998 = vmul.f32 1.0, %v997
    %v999 = vrcp.pop %v983
    %v1000 = vmul.f32 %v983, %v999
    %v1001 = vsub.f32 1.0, %v1000
    %v1002 = vmul.f32 %v999, %v1001
    %v1003 = vadd.f32 %v999, %v1002
    %vm1004 = vweird.f32 %v983
    %vm1005 = vweird.f32 %v999
    %vm1006 = vmor %vm1004, %vm1005
    %v1007 = vsel %vm1006, %v999, %v1003
    %v1008 = vand.u32 2147483647, %v983
    %vm1009 = vcmp.eq.f32.partialorder %v1008, 8.507059e+37
    %v1010 = vand.u32 %v983, 2147483648
    %v1011 = vor.u32 1.1754944e-38, %v1010
    %v1012 = vsel %vm1009, %v1011, %v1007
    %v1013 = vmul.f32 1.0, %v1012
    %1014 = vrot.lane.b32.xlu0 %v787, 32
    %v1015 = vpop.permute.xlu0 %1014
    %1016 = vrot.lane.b32.xlu0 %v788, 32
    %v1017 = vpop.permute.xlu0 %1016
    %v1020 = vmul.f32 %v998, %v1015
    %v1021 = vmul.f32 %v1013, %v1017
    %1024 = vrot.lane.b32.xlu0 %v1020, 96
    %v1025 = vpop.permute.xlu0 %1024
    %1026 = vrot.lane.b32.xlu0 %v1021, 96
    %v1027 = vpop.permute.xlu0 %1026
    %v1028 = vsel %vm229, %v1025, 0
    %v1030 = vsel %vm229, %v1027, 0
    %1032 = vmatpush.msra.mxu0 0.0
    %1033 = vmatpush.msra.mxu0 0.0
    %1034 = vmatpush.msra.mxu0 0.0
    %1035 = vmatpush.msra.mxu0 0.0
    %1036 = vmatpush.msra.mxu0 0.0
    %1037 = vmatpush.msra.mxu0 0.0
    %1038 = vmatpush.msra.mxu0 0.0
    %1039 = vmatpush.msra.mxu0 0.0
    %1040 = vmatpush.msra.mxu0 0.0
    %1041 = vmatpush.msra.mxu0 0.0
    %1042 = vmatpush.msra.mxu0 0.0
    %1043 = vmatpush.msra.mxu0 0.0
    %1044 = vmatpush.msra.mxu0 %v166
    %1045 = vmatpush.msra.mxu0 %v165
    %1046 = vmatpush.msra.mxu0 %v164
    %1047 = vmatpush.msra.mxu0 %v163
    %1048 = vmatmul.f32.gmra.mxu0 %v1028
    %v1049 = vpop.f32.mrf.mxu0
    %v1050 = vadd.f32 0.0, %v1049
    %1051 = vmatmul.f32.gmra.mxu0 %v1030
    %v1052 = vpop.f32.mrf.mxu0
    %v1053 = vadd.f32 0.0, %v1052
    %1054 = vdwg.mxu0
    %1057 = vrot.lane.b32.xlu0 %v1050, 64
    %v1058 = vpop.permute.xlu0 %1057
    %1059 = vrot.lane.b32.xlu0 %v1053, 64
    %v1060 = vpop.permute.xlu0 %1059
    %v1063 = vadd.f32 %v888, %v1058
    %v1064 = vadd.f32 %v891, %v1060
    %v1065 = vadd.f32 %v1063, %v471
    %v1066 = vadd.f32 %v1064, %v471
    %v1067 = vtanh.pop %v1065
    %v1068 = vtanh.pop %v1066
    %v1069 = vsub.f32 1.0, %v948
    %v1070 = vsub.f32 1.0, %v963
    %v1071 = vmul.f32 %v1069, %v787
    %v1072 = vmul.f32 %v1070, %v788
    %1075 = vrot.lane.b32.xlu0 %v1067, 64
    %v1076 = vpop.permute.xlu0 %1075
    %1077 = vrot.lane.b32.xlu0 %v1068, 64
    %v1078 = vpop.permute.xlu0 %1077
    %v1081 = vmul.f32 %v948, %v1076
    %v1082 = vmul.f32 %v963, %v1078
    %v1083 = vadd.f32 %v1071, %v1081
    %v1084 = vadd.f32 %v1072, %v1082
    %1085 = vst.msk [vmem:[#allocation14] sm:$0xff] %vm229, %v1083
    %1086 = vst.msk [vmem:[#allocation14 + $0x8] sm:$0xff] %vm229, %v1084
    // Predicated region
    $region70: #{tpu_custom_call.1} parent=1 // pred_check
      _
    $region71: #{tpu_custom_call.1} parent=1 // pred_check_branch
      %1088 = sbr.rel (0) target = $region73
    $region72: #{tpu_custom_call.1} parent=1 // pred_region
      %1090 = vsyncadd [#allocation4], 0
      %s1091 = sshll.u32 [#allocation14], 4
      %s1092 = int_to_ptr.vmem [resolvable:$true] %s1091
      %s1093 = sshll.u32 %s10, 4
      %s1094 = int_to_ptr.hbm [resolvable:$true] %s1093
      %1099 = dma.vmem_to_hbm [thread:$0]  %s1092, 256, %s1094, [#allocation4], 128, 128, 8
    $region73: #{tpu_custom_call.1} parent=1 // pred_fallthru
      _
    // Predicated region
    $region74: #{tpu_custom_call.1} parent=1 // pred_check
      _
    $region75: #{tpu_custom_call.1} parent=1 // pred_check_branch
      %1101 = sbr.rel (0) target = $region77
    $region76: #{tpu_custom_call.1} parent=1 // pred_region
      %1103 = dma.done [#allocation4], 256
    $region77: #{tpu_custom_call.1} parent=1 // pred_fallthru
      _
    %1104 = vsyncpa [#allocation3], 1
    %1105 = vsyncpa [#allocation6], 1
    %1106 = vsyncpa [#allocation9], 1
    %1107 = vsyncpa [#allocation12], 1
    %1108 = vsyncpa [#allocation4], 1

</llo_original>
